<compile_context>
chip_gen: v6e
topology: v6e:2x2x1
jax: 0.10.0
libtpu: 0.0.40
codegen_flags: <defaults>
</compile_context>

<pallas_src>
import functools

import jax
import jax.numpy as jnp
import numpy as np
from jax import lax
from jax.experimental import pallas as pl
from jax.experimental.pallas import tpu as pltpu


# ---------------------------------------------------------------------------
# Trace-time (numpy) construction of the tiny deterministic linear operators.
# ---------------------------------------------------------------------------
def _adaptive_pool_matrix(in_size: int, out_size: int) -> np.ndarray:
    """(out_size, in_size) matrix reproducing nn.AdaptiveAvgPool2d along 1 axis."""
    m = np.zeros((out_size, in_size), dtype=np.float32)
    for i in range(out_size):
        start = (i * in_size) // out_size
        end = -(-((i + 1) * in_size) // out_size)  # ceil
        m[i, start:end] = 1.0 / (end - start)
    return m


def _bilinear_up_matrix(out_size: int, in_size: int) -> np.ndarray:
    """(out_size, in_size) matrix for 1-D bilinear upsample, align_corners=True."""
    m = np.zeros((out_size, in_size), dtype=np.float32)
    if in_size == 1:
        m[:, 0] = 1.0
        return m
    scale = (in_size - 1) / (out_size - 1)
    for p in range(out_size):
        coord = p * scale
        i0 = int(np.floor(coord))
        i1 = min(i0 + 1, in_size - 1)
        frac = coord - i0
        m[p, i0] += 1.0 - frac
        m[p, i1] += frac
    return m


# ---------------------------------------------------------------------------
# Fused Pallas kernel: grid axis = pyramid level.
# Per level: adaptive avg pool -> 1x1 conv -> BN(train, affine=False) -> ReLU
#            -> bilinear upsample (align_corners=True), batch looped in-kernel.
# ---------------------------------------------------------------------------
def _ppm_fused_kernel(ss_ref, x_ref, w_ref, pool_t_ref, up_t_ref, o_ref, *,
                      n_batch, eps):
    # ss_ref:     (L,) int32 SMEM — valid pooled pixels per image (s*s) per level
    # x_ref:      (N, C, H*W)     — input features (compute dtype, e.g. bf16)
    # w_ref:      (R, C)          — this level's 1x1 conv weight (bias=False)
    # pool_t_ref: (H*W, SSP)      — per-image adaptive-avg-pool operator^T
    #                               (columns >= s*s are zero padding)
    # up_t_ref:   (SSP, H*W)      — per-image bilinear-upsample operator^T
    #                               (rows >= s*s are zero padding)
    # o_ref:      (N, R, H*W) f32 — this level's output block
    level = pl.program_id(0)
    ss = ss_ref[level]                                       # s*s (scalar, SMEM)
    inv_cnt = 1.0 / (jnp.float32(n_batch) * ss.astype(jnp.float32))

    w = w_ref[...]
    pool_t = pool_t_ref[...]
    up_t = up_t_ref[...]
    cdt = x_ref.dtype                                        # compute dtype

    # Pool -> 1x1 conv per image; MXU matmuls with f32 accumulation.
    z_per_image = []
    for n in range(n_batch):
        pooled = jnp.dot(x_ref[n], pool_t,
                         preferred_element_type=jnp.float32)        # (C, SSP)
        z_per_image.append(
            jnp.dot(w, pooled.astype(cdt),
                    preferred_element_type=jnp.float32))            # (R, SSP)

    r_dim, ssp = z_per_image[0].shape

    # BatchNorm2d(affine=False), training-mode batch statistics (f32).
    # Pad columns of z are exactly zero (pool_t pad columns are zero), so the
    # raw sum over all SSP columns equals the sum over the valid s*s columns.
    s1 = sum(jnp.sum(z, axis=1, keepdims=True) for z in z_per_image)  # (R, 1)
    mean = s1 * inv_cnt

    # Centered two-pass variance; mask out pad columns explicitly (they would
    # otherwise contribute (-mean)^2).
    valid = lax.broadcasted_iota(jnp.int32, (r_dim, ssp), 1) < ss
    s2 = sum(
        jnp.sum(jnp.square(jnp.where(valid, z - mean, 0.0)),
                axis=1, keepdims=True)
        for z in z_per_image)                                         # (R, 1)
    inv_std = lax.rsqrt(s2 * inv_cnt + eps)

    # Fused BN + ReLU, then bilinear upsample (align_corners=True).  Garbage in
    # the pad columns after BN is annihilated by the zero pad rows of up_t.
    for n in range(n_batch):
        zr = jnp.maximum((z_per_image[n] - mean) * inv_std, 0.0)      # (R, SSP)
        o_ref[n, :, :] = jnp.dot(zr.astype(cdt), up_t,
                                 preferred_element_type=jnp.float32)  # (R, H*W)


# ---------------------------------------------------------------------------
# PPM forward (Pallas path), jitted wrapper with trace-time constant operators.
# ---------------------------------------------------------------------------
@functools.partial(jax.jit, static_argnames=("bins", "eps", "compute_dtype"))
def ppm_forward(x_nchw, weights, bins, eps=1e-5, compute_dtype=jnp.bfloat16):
    n, c, h, w_sz = x_nchw.shape
    num_levels = len(bins)
    r = weights[0].shape[0]
    hw = h * w_sz

    # Per-image pooling / upsampling operators built with numpy at trace time
    # (compile-time constants; no eager per-call device dispatches).  The pooled
    # axis is padded per the *per-image* bin size only (max s*s), not N*s*s.
    max_ss = max(s * s for s in bins)
    ssp = ((max_ss + 127) // 128) * 128
    pool_t_np = np.zeros((num_levels, hw, ssp), dtype=np.float32)
    up_t_np = np.zeros((num_levels, ssp, hw), dtype=np.float32)
    ss_np = np.zeros((num_levels,), dtype=np.int32)
    for li, s in enumerate(bins):
        ph = _adaptive_pool_matrix(h, s)              # (s, H)
        pw = _adaptive_pool_matrix(w_sz, s)           # (s, W)
        uh = _bilinear_up_matrix(h, s)                # (H, s)
        uw = _bilinear_up_matrix(w_sz, s)             # (W, s)
        ss = s * s
        pool_t_np[li, :, :ss] = np.kron(ph, pw).T     # (H*W, s*s)  per image
        up_t_np[li, :ss, :] = np.kron(uh, uw).T       # (s*s, H*W)  per image
        ss_np[li] = ss

    pool_t = jnp.asarray(pool_t_np).astype(compute_dtype)     # (L, H*W, SSP)
    up_t = jnp.asarray(up_t_np).astype(compute_dtype)         # (L, SSP, H*W)
    w_stk = jnp.stack(list(weights)).astype(compute_dtype)    # (L, R, C)
    ss_arr = jnp.asarray(ss_np)                                # (L,) int32
    x_flat = x_nchw.reshape(n, c, hw).astype(compute_dtype)    # contiguous reshape

    kernel = functools.partial(_ppm_fused_kernel, n_batch=n, eps=eps)
    y = pl.pallas_call(
        kernel,
        out_shape=jax.ShapeDtypeStruct((n, num_levels, r, hw), jnp.float32),
        grid_spec=pltpu.PrefetchScalarGridSpec(
            num_scalar_prefetch=1,
            grid=(num_levels,),
            in_specs=[
                # x: constant block index -> fetched once across all levels.
                pl.BlockSpec((n, c, hw), lambda l, ss: (0, 0, 0)),
                pl.BlockSpec((None, r, c), lambda l, ss: (l, 0, 0)),
                pl.BlockSpec((None, hw, ssp), lambda l, ss: (l, 0, 0)),
                pl.BlockSpec((None, ssp, hw), lambda l, ss: (l, 0, 0)),
            ],
            out_specs=pl.BlockSpec((n, None, r, hw), lambda l, ss: (0, l, 0, 0)),
        ),
        compiler_params=pltpu.CompilerParams(
            dimension_semantics=("parallel",),          # v7x: levels across 2 TCs
            vmem_limit_bytes=64 * 1024 * 1024,          # v5e default is only 16 MiB
        ),
    )(ss_arr, x_flat, w_stk, pool_t, up_t)              # (N, L, R, H*W)

    # (N, L, R, H*W) -> (N, L*R, H, W) is a contiguous, transpose-free reshape.
    ppm = y.reshape(n, num_levels * r, h, w_sz)
    return jnp.concatenate([x_nchw, ppm], axis=1)


# ---------------------------------------------------------------------------
# Pure-JAX reference following the PyTorch op order (pool -> conv -> BN(train)
# -> ReLU -> bilinear upsample align_corners=True), all in float32.
# ---------------------------------------------------------------------------
def ppm_reference(x_nchw, weights, bins, eps=1e-5):
    n, c, h, w_sz = x_nchw.shape
    outs = [x_nchw]
    for s, wmat in zip(bins, weights):
        ph = jnp.asarray(_adaptive_pool_matrix(h, s))
        pw = jnp.asarray(_adaptive_pool_matrix(w_sz, s))
        uh = jnp.asarray(_bilinear_up_matrix(h, s))
        uw = jnp.asarray(_bilinear_up_matrix(w_sz, s))
        pooled = jnp.einsum('ih,nchw,jw->ncij', ph, x_nchw, pw)
        conv = jnp.einsum('rc,ncij->nrij', wmat, pooled)
        mean = jnp.mean(conv, axis=(0, 2, 3), keepdims=True)
        var = jnp.mean((conv - mean) ** 2, axis=(0, 2, 3), keepdims=True)
        bn = (conv - mean) * jax.lax.rsqrt(var + eps)
        relu = jnp.maximum(bn, 0.0)
        up = jnp.einsum('hi,nrij,wj->nrhw', uh, relu, uw)
        outs.append(up)
    return jnp.concatenate(outs, axis=1)


if __name__ == "__main__":
    # Small shapes consistent with the module: PPM(in_dim=4, reduction_dim=2,
    # bins=(1, 2, 3, 6)) applied to x of shape (N=2, 4, 16, 16).
    N, IN_DIM, H, W = 2, 4, 16, 16
    RED_DIM = 2
    BINS = (1, 2, 3, 6)

    key = jax.random.PRNGKey(0)
    kx, *kws = jax.random.split(key, 1 + len(BINS))
    x = jax.random.normal(kx, (N, IN_DIM, H, W), dtype=jnp.float32)
    # Deterministic synthetic 1x1-conv weights (bias=False), one per bin.
    conv_weights = tuple(
        0.5 * jax.random.normal(k, (RED_DIM, IN_DIM), dtype=jnp.float32) for k in kws
    )

    ref = ppm_reference(x, conv_weights, BINS)
    expected_c = IN_DIM + len(BINS) * RED_DIM

    # Float32 compute path: tight validation of the kernel math.
    out_f32 = jax.block_until_ready(
        ppm_forward(x, conv_weights, BINS, compute_dtype=jnp.float32))
    assert out_f32.shape == (N, expected_c, H, W), out_f32.shape
    err_f32 = float(jnp.max(jnp.abs(out_f32 - ref)))
    assert jnp.allclose(out_f32, ref, atol=1e-3, rtol=1e-3), err_f32

    # bf16 compute path (perf default): bf16 MXU operands, f32 accumulation /
    # BN statistics — re-validated at a bf16-appropriate tolerance.
    out_bf16 = jax.block_until_ready(ppm_forward(x, conv_weights, BINS))
    assert out_bf16.shape == (N, expected_c, H, W), out_bf16.shape
    err_bf16 = float(jnp.max(jnp.abs(out_bf16 - ref)))
    assert jnp.allclose(out_bf16, ref, atol=5e-2, rtol=5e-2), err_bf16

    print("KERNEL_OK")
</pallas_src>

<mosaic_0001>
module attributes {stable_mosaic.version = 11 : i64} {
  func.func @_ppm_fused_kernel(%arg0: i32, %arg1: memref<4xi32, #tpu.memory_space<smem>>, %arg2: memref<2x4x256xf32, #tpu.memory_space<vmem>>, %arg3: memref<1x2x4xf32, #tpu.memory_space<vmem>>, %arg4: memref<1x256x128xf32, #tpu.memory_space<vmem>>, %arg5: memref<1x128x256xf32, #tpu.memory_space<vmem>>, %arg6: memref<2x1x2x256xf32, #tpu.memory_space<vmem>>) attributes {dimension_semantics = [#tpu.dimension_semantics<parallel>], iteration_bounds = array<i64: 4>, scalar_prefetch = 1 : i64, scratch_operands = 0 : i64, tpu.core_type = #tpu.core_type<tc>, window_params = [{pipeline_mode = #tpu.pipeline_mode<synchronous>, transform_indices = @transform_0, window_bounds = array<i64: 2, 4, 256>}, {transform_indices = @transform_1, window_bounds = array<i64: 1, 2, 4>}, {transform_indices = @transform_2, window_bounds = array<i64: 1, 256, 128>}, {transform_indices = @transform_3, window_bounds = array<i64: 1, 128, 256>}, {transform_indices = @transform_4, window_bounds = array<i64: 2, 1, 2, 256>}]} {
    %0 = arith.index_cast %arg0 : i32 to index
    %1 = memref.load %arg1[%0] : memref<4xi32, #tpu.memory_space<smem>>
    %2 = arith.sitofp %1 : i32 to f32
    %cst = arith.constant 2.000000e+00 : f32
    %3 = arith.mulf %cst, %2 : f32
    %cst_0 = arith.constant 1.000000e+00 : f32
    %4 = arith.divf %cst_0, %3 : f32
    %c0 = arith.constant 0 : index
    %c0_1 = arith.constant 0 : index
    %c0_2 = arith.constant 0 : index
    %5 = vector.load %arg3[%c0, %c0_1, %c0_2] : memref<1x2x4xf32, #tpu.memory_space<vmem>>, vector<1x2x4xf32>
    %6 = vector.shape_cast %5 : vector<1x2x4xf32> to vector<2x4xf32>
    %c0_3 = arith.constant 0 : index
    %c0_4 = arith.constant 0 : index
    %c0_5 = arith.constant 0 : index
    %7 = vector.load %arg4[%c0_3, %c0_4, %c0_5] : memref<1x256x128xf32, #tpu.memory_space<vmem>>, vector<1x256x128xf32>
    %8 = vector.shape_cast %7 : vector<1x256x128xf32> to vector<256x128xf32>
    %c0_6 = arith.constant 0 : index
    %c0_7 = arith.constant 0 : index
    %c0_8 = arith.constant 0 : index
    %9 = vector.load %arg5[%c0_6, %c0_7, %c0_8] : memref<1x128x256xf32, #tpu.memory_space<vmem>>, vector<1x128x256xf32>
    %10 = vector.shape_cast %9 : vector<1x128x256xf32> to vector<128x256xf32>
    %c0_9 = arith.constant 0 : index
    %c0_10 = arith.constant 0 : index
    %c0_11 = arith.constant 0 : index
    %11 = vector.load %arg2[%c0_9, %c0_10, %c0_11] : memref<2x4x256xf32, #tpu.memory_space<vmem>>, vector<1x4x256xf32>
    %12 = vector.shape_cast %11 : vector<1x4x256xf32> to vector<4x256xf32>
    %cst_12 = arith.constant dense<0.000000e+00> : vector<4x128xf32>
    %13 = tpu.matmul %12, %8, %cst_12 {dimension_numbers = #tpu.dot_dimension_numbers<[1], [0], [0], [1], [0, 0, 1, 1], [], []>} : vector<4x256xf32>, vector<256x128xf32>, vector<4x128xf32> -> vector<4x128xf32>
    %cst_13 = arith.constant dense<0.000000e+00> : vector<2x128xf32>
    %14 = tpu.matmul %6, %13, %cst_13 {dimension_numbers = #tpu.dot_dimension_numbers<[1], [0], [0], [1], [0, 0, 1, 1], [], []>} : vector<2x4xf32>, vector<4x128xf32>, vector<2x128xf32> -> vector<2x128xf32>
    %c1 = arith.constant 1 : index
    %c0_14 = arith.constant 0 : index
    %c0_15 = arith.constant 0 : index
    %15 = vector.load %arg2[%c1, %c0_14, %c0_15] : memref<2x4x256xf32, #tpu.memory_space<vmem>>, vector<1x4x256xf32>
    %16 = vector.shape_cast %15 : vector<1x4x256xf32> to vector<4x256xf32>
    %cst_16 = arith.constant dense<0.000000e+00> : vector<4x128xf32>
    %17 = tpu.matmul %16, %8, %cst_16 {dimension_numbers = #tpu.dot_dimension_numbers<[1], [0], [0], [1], [0, 0, 1, 1], [], []>} : vector<4x256xf32>, vector<256x128xf32>, vector<4x128xf32> -> vector<4x128xf32>
    %cst_17 = arith.constant dense<0.000000e+00> : vector<2x128xf32>
    %18 = tpu.matmul %6, %17, %cst_17 {dimension_numbers = #tpu.dot_dimension_numbers<[1], [0], [0], [1], [0, 0, 1, 1], [], []>} : vector<2x4xf32>, vector<4x128xf32>, vector<2x128xf32> -> vector<2x128xf32>
    %cst_18 = arith.constant dense<0.000000e+00> : vector<2xf32>
    %19 = vector.multi_reduction <add>, %14, %cst_18 [1] : vector<2x128xf32> to vector<2xf32>
    %20 = vector.shape_cast %19 : vector<2xf32> to vector<2x1xf32>
    %cst_19 = arith.constant 0.000000e+00 : f32
    %21 = vector.broadcast %cst_19 : f32 to vector<2x1xf32>
    %22 = arith.addf %21, %20 : vector<2x1xf32>
    %cst_20 = arith.constant dense<0.000000e+00> : vector<2xf32>
    %23 = vector.multi_reduction <add>, %18, %cst_20 [1] : vector<2x128xf32> to vector<2xf32>
    %24 = vector.shape_cast %23 : vector<2xf32> to vector<2x1xf32>
    %25 = arith.addf %22, %24 : vector<2x1xf32>
    %26 = vector.broadcast %4 : f32 to vector<2x1xf32>
    %27 = arith.mulf %25, %26 : vector<2x1xf32>
    %28 = tpu.iota {dimensions = array<i32: 1>} : vector<2x128xi32>
    %29 = vector.broadcast %1 : i32 to vector<2x128xi32>
    %30 = arith.cmpi slt, %28, %29 : vector<2x128xi32>
    %31 = vector.broadcast %27 : vector<2x1xf32> to vector<2x128xf32>
    %32 = arith.subf %14, %31 : vector<2x128xf32>
    %cst_21 = arith.constant 0.000000e+00 : f32
    %33 = vector.broadcast %cst_21 : f32 to vector<2x128xf32>
    %34 = arith.select %30, %32, %33 : vector<2x128xi1>, vector<2x128xf32>
    %35 = arith.mulf %34, %34 : vector<2x128xf32>
    %cst_22 = arith.constant dense<0.000000e+00> : vector<2xf32>
    %36 = vector.multi_reduction <add>, %35, %cst_22 [1] : vector<2x128xf32> to vector<2xf32>
    %37 = vector.shape_cast %36 : vector<2xf32> to vector<2x1xf32>
    %cst_23 = arith.constant 0.000000e+00 : f32
    %38 = vector.broadcast %cst_23 : f32 to vector<2x1xf32>
    %39 = arith.addf %38, %37 : vector<2x1xf32>
    %40 = vector.broadcast %27 : vector<2x1xf32> to vector<2x128xf32>
    %41 = arith.subf %18, %40 : vector<2x128xf32>
    %cst_24 = arith.constant 0.000000e+00 : f32
    %42 = vector.broadcast %cst_24 : f32 to vector<2x128xf32>
    %43 = arith.select %30, %41, %42 : vector<2x128xi1>, vector<2x128xf32>
    %44 = arith.mulf %43, %43 : vector<2x128xf32>
    %cst_25 = arith.constant dense<0.000000e+00> : vector<2xf32>
    %45 = vector.multi_reduction <add>, %44, %cst_25 [1] : vector<2x128xf32> to vector<2xf32>
    %46 = vector.shape_cast %45 : vector<2xf32> to vector<2x1xf32>
    %47 = arith.addf %39, %46 : vector<2x1xf32>
    %48 = vector.broadcast %4 : f32 to vector<2x1xf32>
    %49 = arith.mulf %47, %48 : vector<2x1xf32>
    %cst_26 = arith.constant 9.99999974E-6 : f32
    %50 = vector.broadcast %cst_26 : f32 to vector<2x1xf32>
    %51 = arith.addf %49, %50 : vector<2x1xf32>
    %52 = math.rsqrt %51 : vector<2x1xf32>
    %53 = vector.broadcast %27 : vector<2x1xf32> to vector<2x128xf32>
    %54 = arith.subf %14, %53 : vector<2x128xf32>
    %55 = vector.broadcast %52 : vector<2x1xf32> to vector<2x128xf32>
    %56 = arith.mulf %54, %55 : vector<2x128xf32>
    %cst_27 = arith.constant 0.000000e+00 : f32
    %57 = vector.broadcast %cst_27 : f32 to vector<2x128xf32>
    %58 = arith.maximumf %56, %57 : vector<2x128xf32>
    %cst_28 = arith.constant dense<0.000000e+00> : vector<2x256xf32>
    %59 = tpu.matmul %58, %10, %cst_28 {dimension_numbers = #tpu.dot_dimension_numbers<[1], [0], [0], [1], [0, 0, 1, 1], [], []>} : vector<2x128xf32>, vector<128x256xf32>, vector<2x256xf32> -> vector<2x256xf32>
    %c0_29 = arith.constant 0 : index
    %c0_30 = arith.constant 0 : index
    %c0_31 = arith.constant 0 : index
    %c0_32 = arith.constant 0 : index
    %60 = vector.load %arg6[%c0_29, %c0_30, %c0_31, %c0_32] : memref<2x1x2x256xf32, #tpu.memory_space<vmem>>, vector<1x1x2x256xf32>
    %61 = vector.shape_cast %60 : vector<1x1x2x256xf32> to vector<2x256xf32>
    %62 = vector.shape_cast %59 : vector<2x256xf32> to vector<1x1x2x256xf32>
    tpu.vector_store %arg6[%c0_29, %c0_30, %c0_31, %c0_32], %62 {strides = array<i32>} : memref<2x1x2x256xf32, #tpu.memory_space<vmem>>, vector<1x1x2x256xf32>,
    %63 = vector.broadcast %27 : vector<2x1xf32> to vector<2x128xf32>
    %64 = arith.subf %18, %63 : vector<2x128xf32>
    %65 = vector.broadcast %52 : vector<2x1xf32> to vector<2x128xf32>
    %66 = arith.mulf %64, %65 : vector<2x128xf32>
    %cst_33 = arith.constant 0.000000e+00 : f32
    %67 = vector.broadcast %cst_33 : f32 to vector<2x128xf32>
    %68 = arith.maximumf %66, %67 : vector<2x128xf32>
    %cst_34 = arith.constant dense<0.000000e+00> : vector<2x256xf32>
    %69 = tpu.matmul %68, %10, %cst_34 {dimension_numbers = #tpu.dot_dimension_numbers<[1], [0], [0], [1], [0, 0, 1, 1], [], []>} : vector<2x128xf32>, vector<128x256xf32>, vector<2x256xf32> -> vector<2x256xf32>
    %c1_35 = arith.constant 1 : index
    %c0_36 = arith.constant 0 : index
    %c0_37 = arith.constant 0 : index
    %c0_38 = arith.constant 0 : index
    %70 = vector.load %arg6[%c1_35, %c0_36, %c0_37, %c0_38] : memref<2x1x2x256xf32, #tpu.memory_space<vmem>>, vector<1x1x2x256xf32>
    %71 = vector.shape_cast %70 : vector<1x1x2x256xf32> to vector<2x256xf32>
    %72 = vector.shape_cast %69 : vector<2x256xf32> to vector<1x1x2x256xf32>
    tpu.vector_store %arg6[%c1_35, %c0_36, %c0_37, %c0_38], %72 {strides = array<i32>} : memref<2x1x2x256xf32, #tpu.memory_space<vmem>>, vector<1x1x2x256xf32>,
    return
  }
  func.func @transform_0(%arg0: i32, %arg1: memref<4xi32, #tpu.memory_space<smem>>) -> (i32, i32, i32) {
    %c0_i32 = arith.constant 0 : i32
    %c0_i32_0 = arith.constant 0 : i32
    %c0_i32_1 = arith.constant 0 : i32
    %c0_i32_2 = arith.constant 0 : i32
    return %c0_i32, %c0_i32_0, %c0_i32_1 : i32, i32, i32
  }
  func.func @transform_1(%arg0: i32, %arg1: memref<4xi32, #tpu.memory_space<smem>>) -> (i32, i32, i32) {
    %c0_i32 = arith.constant 0 : i32
    %c0_i32_0 = arith.constant 0 : i32
    %c0_i32_1 = arith.constant 0 : i32
    return %arg0, %c0_i32, %c0_i32_0 : i32, i32, i32
  }
  func.func @transform_2(%arg0: i32, %arg1: memref<4xi32, #tpu.memory_space<smem>>) -> (i32, i32, i32) {
    %c0_i32 = arith.constant 0 : i32
    %c0_i32_0 = arith.constant 0 : i32
    %c0_i32_1 = arith.constant 0 : i32
    return %arg0, %c0_i32, %c0_i32_0 : i32, i32, i32
  }
  func.func @transform_3(%arg0: i32, %arg1: memref<4xi32, #tpu.memory_space<smem>>) -> (i32, i32, i32) {
    %c0_i32 = arith.constant 0 : i32
    %c0_i32_0 = arith.constant 0 : i32
    %c0_i32_1 = arith.constant 0 : i32
    return %arg0, %c0_i32, %c0_i32_0 : i32, i32, i32
  }
  func.func @transform_4(%arg0: i32, %arg1: memref<4xi32, #tpu.memory_space<smem>>) -> (i32, i32, i32, i32) {
    %c0_i32 = arith.constant 0 : i32
    %c0_i32_0 = arith.constant 0 : i32
    %c0_i32_1 = arith.constant 0 : i32
    %c0_i32_2 = arith.constant 0 : i32
    return %c0_i32, %arg0, %c0_i32_0, %c0_i32_1 : i32, i32, i32, i32
  }
}

</mosaic_0001>

<llo_original>
// kernel: ppm_forward.1
$region0: #{ppm_forward.1}
  #allocation0 [shape = 'u32[]', space=smem, size = 0x4, offset = 0x4, fixed_abs, tag = 'smem constant byte address 0x4 - core index']
  #allocation1 [shape = 'u32[144,128]{1,0:T(1,128)}', space=vmem, size = 0x12000, scoped, tag = 'internal scratch']
  #allocation2 [shape = 's32[1]{0}', space=sflag, size = 0x4, scoped, tag = 'scoped memory for ppm_forward.1']
  #allocation3 [shape = 'u8[512]{0}', space=smem, size = 0x200, scoped, tag = 'prefetched SMEM operand 0']
  %s0 = inlined_call_operand.vmem [shape: s32[4], index: 0, kind: input, shape index: {}]
  %s1 = inlined_call_operand.vmem [shape: f32[2,4,256], index: 1, kind: input, shape index: {}]
  %s2 = inlined_call_operand.vmem [shape: f32[4,2,4], index: 2, kind: input, shape index: {}]
  %s3 = inlined_call_operand.hbm [shape: f32[4,256,128], index: 3, kind: input, shape index: {}]
  %s4 = inlined_call_operand.hbm [shape: f32[4,128,256], index: 4, kind: input, shape index: {}]
  %s5 = inlined_call_operand.vmem [shape: f32[2,4,2,256], index: 5, kind: output, shape index: {}]
  %s6 = sld [smem:[#allocation0]]
  $region94: #{ppm_forward.1} parent=0
    _
  %s8 = ssub.s32 1, %s6
  %s9 = scalar_select 0, %s8, %s6
  %s10 = sshll.u32 %s0, 4
  %s11 = int_to_ptr.vmem [resolvable:$true] %s10
  %13 = dma.vmem_to_smem %s11, 16, [#allocation3], [#allocation2]
  %14 = dma.done [#allocation2], 16
  %15 = sfence
  $region1: #{ppm_forward.1} parent=0
    #allocation4 [shape = 'u8[262144]{0}', space=vmem, size = 0x40000, scoped, tag = 'input window, operand 3']
    #allocation5 [shape = 's32[2]{0}', space=sflag, size = 0x8, scoped, tag = 'scoped memory for ppm_forward.1']
    #allocation6 [shape = 'u8[262144]{0}', space=vmem, size = 0x40000, scoped, tag = 'input window, operand 4']
    #allocation7 [shape = 's32[2]{0}', space=sflag, size = 0x8, scoped, tag = 'scoped memory for ppm_forward.1']
    #allocation8 [shape = 'u8[8192]{0}', space=vmem, size = 0x2000, scoped, tag = 'output window, operand 0']
    %16 = vsyncpa [#allocation5], 0
    %s17 = scalar_lea.sflag [#allocation5], 1
    %18 = vsyncpa %s17, 0
    %19 = vsyncpa [#allocation7], 0
    %s20 = scalar_lea.sflag [#allocation7], 1
    %21 = vsyncpa %s20, 0
    loop: start=0, step=1, limit=6
    $region2: #{ppm_forward.1} parent=1 // loop_pre_header
      _
    $region3: #{ppm_forward.1} parent=1 // loop_header
      %s23 = sphi 0, %s27
      %p24 = scmp.ge.s32.totalorder %s23, 6
      %s31 = sphi 0, %s31
      %s33 = sphi 0, %s31
      %s34 = sphi 0, %s33
      %s48 = sphi 0, %s34
      %s54 = sphi 0, %s56
      %s57 = sphi 0, %s54
      %s58 = sphi 0, %s57
      %s74 = sphi 0, %s58
      %s80 = sphi 0, %s82
      %s83 = sphi 0, %s80
      %s84 = sphi 0, %s83
      %s100 = sphi 0, %s84
      %s106 = sphi 0, %s108
      %s109 = sphi 0, %s106
      %s110 = sphi 0, %s109
      %s126 = sphi 0, %s110
      %s132 = sphi 0, %s134
      %s135 = sphi 0, %s132
      %s136 = sphi 0, %s135
      %s152 = sphi 0, %s136
    $region4: #{ppm_forward.1} parent=1 // loop_header_branch
      %26 = sbr.rel (%p24) target = $region8
    $region5: #{ppm_forward.1} parent=1 // loop_body
      %s28 = ssub.s32 %s23, 1
      %s29 = ssub.s32 %s23, 2
      %s30 = sadd.s32 %s23, 1
      %s32 = sadd.s32 %s31, 1
      %p35 = scmp.eq.s32.totalorder %s23, 3
      %p36 = scmp.ne.s32.totalorder %s31, %s33
      %p37 = scmp.eq.s32.totalorder %s23, 0
      %p38 = por %p36, %p37
      %p39 = scmp.ne.s32.totalorder %s31, %s33
      %p40 = scmp.eq.s32.totalorder %s28, 3
      %p41 = por %p39, %p40
      %p42 = scmp.ne.s32.totalorder %s33, %s34
      %p43 = scmp.eq.s32.totalorder %s28, 0
      %p44 = por %p42, %p43
      %p45 = scmp.ne.s32.totalorder %s33, %s34
      %p46 = scmp.eq.s32.totalorder %s29, 3
      %p47 = por %p45, %p46
      %p49 = scmp.ne.s32.totalorder %s34, %s48
      %p50 = scmp.eq.s32.totalorder %s29, 0
      %p51 = por %p49, %p50
      %s52 = ssub.s32 %s23, %s30
      %p53 = scmp.eq.s32.totalorder %s52, 0
      %s55 = sadd.s32 %s54, 1
      %s56 = scalar_select %p53, %s54, %s55
      %p59 = pneg %p53
      %p60 = scmp.eq.s32.totalorder %s23, 3
      %p61 = por %p59, %p60
      %p62 = scmp.ne.s32.totalorder %s54, %s57
      %p63 = scmp.eq.s32.totalorder %s23, 0
      %p64 = por %p62, %p63
      %p65 = scmp.ne.s32.totalorder %s54, %s57
      %p66 = scmp.eq.s32.totalorder %s28, 3
      %p67 = por %p65, %p66
      %p68 = scmp.ne.s32.totalorder %s57, %s58
      %p69 = scmp.eq.s32.totalorder %s28, 0
      %p70 = por %p68, %p69
      %p71 = scmp.ne.s32.totalorder %s57, %s58
      %p72 = scmp.eq.s32.totalorder %s29, 3
      %p73 = por %p71, %p72
      %p75 = scmp.ne.s32.totalorder %s58, %s74
      %p76 = scmp.eq.s32.totalorder %s29, 0
      %p77 = por %p75, %p76
      %s78 = ssub.s32 %s23, %s30
      %p79 = scmp.eq.s32.totalorder %s78, 0
      %s81 = sadd.s32 %s80, 1
      %s82 = scalar_select %p79, %s80, %s81
      %p85 = pneg %p79
      %p86 = scmp.eq.s32.totalorder %s23, 3
      %p87 = por %p85, %p86
      %p88 = scmp.ne.s32.totalorder %s80, %s83
      %p89 = scmp.eq.s32.totalorder %s23, 0
      %p90 = por %p88, %p89
      %p91 = scmp.ne.s32.totalorder %s80, %s83
      %p92 = scmp.eq.s32.totalorder %s28, 3
      %p93 = por %p91, %p92
      %p94 = scmp.ne.s32.totalorder %s83, %s84
      %p95 = scmp.eq.s32.totalorder %s28, 0
      %p96 = por %p94, %p95
      %p97 = scmp.ne.s32.totalorder %s83, %s84
      %p98 = scmp.eq.s32.totalorder %s29, 3
      %p99 = por %p97, %p98
      %p101 = scmp.ne.s32.totalorder %s84, %s100
      %p102 = scmp.eq.s32.totalorder %s29, 0
      %p103 = por %p101, %p102
      %s104 = ssub.s32 %s23, %s30
      %p105 = scmp.eq.s32.totalorder %s104, 0
      %s107 = sadd.s32 %s106, 1
      %s108 = scalar_select %p105, %s106, %s107
      %p111 = pneg %p105
      %p112 = scmp.eq.s32.totalorder %s23, 3
      %p113 = por %p111, %p112
      %p114 = scmp.ne.s32.totalorder %s106, %s109
      %p115 = scmp.eq.s32.totalorder %s23, 0
      %p116 = por %p114, %p115
      %p117 = scmp.ne.s32.totalorder %s106, %s109
      %p118 = scmp.eq.s32.totalorder %s28, 3
      %p119 = por %p117, %p118
      %p120 = scmp.ne.s32.totalorder %s109, %s110
      %p121 = scmp.eq.s32.totalorder %s28, 0
      %p122 = por %p120, %p121
      %p123 = scmp.ne.s32.totalorder %s109, %s110
      %p124 = scmp.eq.s32.totalorder %s29, 3
      %p125 = por %p123, %p124
      %p127 = scmp.ne.s32.totalorder %s110, %s126
      %p128 = scmp.eq.s32.totalorder %s29, 0
      %p129 = por %p127, %p128
      %s130 = ssub.s32 %s23, %s30
      %p131 = scmp.eq.s32.totalorder %s130, 0
      %s133 = sadd.s32 %s132, 1
      %s134 = scalar_select %p131, %s132, %s133
      %p137 = pneg %p131
      %p138 = scmp.eq.s32.totalorder %s23, 3
      %p139 = por %p137, %p138
      %p140 = scmp.ne.s32.totalorder %s132, %s135
      %p141 = scmp.eq.s32.totalorder %s23, 0
      %p142 = por %p140, %p141
      %p143 = scmp.ne.s32.totalorder %s132, %s135
      %p144 = scmp.eq.s32.totalorder %s28, 3
      %p145 = por %p143, %p144
      %p146 = scmp.ne.s32.totalorder %s135, %s136
      %p147 = scmp.eq.s32.totalorder %s28, 0
      %p148 = por %p146, %p147
      %p149 = scmp.ne.s32.totalorder %s135, %s136
      %p150 = scmp.eq.s32.totalorder %s29, 3
      %p151 = por %p149, %p150
      %p153 = scmp.ne.s32.totalorder %s136, %s152
      %p154 = scmp.eq.s32.totalorder %s29, 0
      %p155 = por %p153, %p154
      %p156 = scmp.le.s32.totalorder 1, %s23
      %p157 = scmp.lt.s32.totalorder %s23, 5
      %p158 = pnand %p156, %p157
      %p159 = pneg %p158
      // Predicated region
      $region9: #{ppm_forward.1} parent=5 // pred_check
        _
      $region10: #{ppm_forward.1} parent=5 // pred_check_branch
        %161 = sbr.rel (%p158) target = $region12
      $region11: #{ppm_forward.1} parent=5 // pred_region
        %s162 = ssub.s32 %s23, 1
        // Predicated region
        $region13: #{ppm_forward.1} parent=11 // pred_check
          %p163 = pneg %p44
        $region14: #{ppm_forward.1} parent=11 // pred_check_branch
          %165 = sbr.rel (%p163) target = $region16
        $region15: #{ppm_forward.1} parent=11 // pred_region
          _
        $region16: #{ppm_forward.1} parent=11 // pred_fallthru
          _
      $region12: #{ppm_forward.1} parent=5 // pred_fallthru
        _
      %p166 = scmp.lt.s32.totalorder %s23, 4
      // Predicated region
      $region17: #{ppm_forward.1} parent=5 // pred_check
        %p167 = pneg %p166
      $region18: #{ppm_forward.1} parent=5 // pred_check_branch
        %169 = sbr.rel (%p167) target = $region20
      $region19: #{ppm_forward.1} parent=5 // pred_region
        // Predicated region
        $region21: #{ppm_forward.1} parent=19 // pred_check
          %p170 = pneg %p64
        $region22: #{ppm_forward.1} parent=19 // pred_check_branch
          %172 = sbr.rel (%p170) target = $region24
        $region23: #{ppm_forward.1} parent=19 // pred_region
          %p173 = scmp.lt.s32.totalorder %s23, 3
          %s174 = scalar_select %p173, %s23, 3
          %s175 = smul.addr %s174, 2
          %s176 = scalar_lea.vmem %s2, %s175
        $region24: #{ppm_forward.1} parent=19 // pred_fallthru
          _
        // Predicated region
        $region25: #{ppm_forward.1} parent=19 // pred_check
          %p177 = pneg %p90
        $region26: #{ppm_forward.1} parent=19 // pred_check_branch
          %179 = sbr.rel (%p177) target = $region28
        $region27: #{ppm_forward.1} parent=19 // pred_region
          %s180 = sand.u32 %s80, 1
          %s181 = scalar_lea.sflag [#allocation5], %s180
          %s182 = sand.u32 %s80, 1
          %s183 = smul.addr %s182, 256
          %s184 = scalar_lea.vmem [#allocation4], %s183
          %s186 = ssub.s32 4096, 4096
          %187 = vsyncadd %s181, %s186
          %s188 = smul.addr %s23, 32
          %s189 = smul.addr %s188, 128
          %s190 = scalar_lea.hbm %s3, %s189
          %s191 = sshll.u32 %s184, 4
          %s192 = int_to_ptr.vmem [resolvable:$true] %s191
          %197 = dma.hbm_to_vmem [thread:$0]  %s190, 4096, %s192, %s181, 128, 128, 8
        $region28: #{ppm_forward.1} parent=19 // pred_fallthru
          _
        // Predicated region
        $region29: #{ppm_forward.1} parent=19 // pred_check
          %p198 = pneg %p116
        $region30: #{ppm_forward.1} parent=19 // pred_check_branch
          %200 = sbr.rel (%p198) target = $region32
        $region31: #{ppm_forward.1} parent=19 // pred_region
          %s201 = sand.u32 %s106, 1
          %s202 = scalar_lea.sflag [#allocation7], %s201
          %s203 = sand.u32 %s106, 1
          %s204 = smul.addr %s203, 256
          %s205 = scalar_lea.vmem [#allocation6], %s204
          %s207 = ssub.s32 4096, 4096
          %208 = vsyncadd %s202, %s207
          %s209 = smul.addr %s23, 32
          %s210 = smul.addr %s209, 128
          %s211 = scalar_lea.hbm %s4, %s210
          %s212 = sshll.u32 %s205, 4
          %s213 = int_to_ptr.vmem [resolvable:$true] %s212
          %218 = dma.hbm_to_vmem [thread:$0]  %s211, 4096, %s213, %s202, 256, 256, 16
        $region32: #{ppm_forward.1} parent=19 // pred_fallthru
          _
      $region20: #{ppm_forward.1} parent=5 // pred_fallthru
        _
      %p219 = scmp.le.s32.totalorder 1, %s23
      %p220 = scmp.lt.s32.totalorder %s23, 5
      %p221 = pnand %p219, %p220
      %p222 = pneg %p221
      // Predicated region
      $region33: #{ppm_forward.1} parent=5 // pred_check
        _
      $region34: #{ppm_forward.1} parent=5 // pred_check_branch
        %224 = sbr.rel (%p221) target = $region36
      $region35: #{ppm_forward.1} parent=5 // pred_region
        %s225 = ssub.s32 %s23, 1
        %s226 = sand.u32 %s83, 1
        %s227 = scalar_lea.sflag [#allocation5], %s226
        %s228 = sand.u32 %s83, 1
        %s229 = smul.addr %s228, 256
        %s230 = scalar_lea.vmem [#allocation4], %s229
        // Predicated region
        $region37: #{ppm_forward.1} parent=35 // pred_check
          %p231 = pneg %p96
        $region38: #{ppm_forward.1} parent=35 // pred_check_branch
          %233 = sbr.rel (%p231) target = $region40
        $region39: #{ppm_forward.1} parent=35 // pred_region
          %234 = dma.done %s227, 4096
        $region40: #{ppm_forward.1} parent=35 // pred_fallthru
          _
        %s235 = sand.u32 %s109, 1
        %s236 = scalar_lea.sflag [#allocation7], %s235
        %s237 = sand.u32 %s109, 1
        %s238 = smul.addr %s237, 256
        %s239 = scalar_lea.vmem [#allocation6], %s238
        // Predicated region
        $region41: #{ppm_forward.1} parent=35 // pred_check
          %p240 = pneg %p122
        $region42: #{ppm_forward.1} parent=35 // pred_check_branch
          %242 = sbr.rel (%p240) target = $region44
        $region43: #{ppm_forward.1} parent=35 // pred_region
          %243 = dma.done %s236, 4096
        $region44: #{ppm_forward.1} parent=35 // pred_fallthru
          _
        %p244 = pneg %p44
        %p245 = pneg %p41
        %p246 = scmp.lt.s32.totalorder %s28, 3
        %s247 = scalar_select %p246, %s28, 3
        %s248 = smul.addr %s247, 2
        %s249 = scalar_lea.vmem %s2, %s248
        %p250 = pneg %p70
        %p251 = pneg %p67
        %s252 = sand.u32 %s83, 1
        %s253 = scalar_lea.sflag [#allocation5], %s252
        %s254 = sand.u32 %s83, 1
        %s255 = smul.addr %s254, 256
        %s256 = scalar_lea.vmem [#allocation4], %s255
        %p257 = pneg %p96
        %p258 = pneg %p93
        %s259 = sand.u32 %s109, 1
        %s260 = scalar_lea.sflag [#allocation7], %s259
        %s261 = sand.u32 %s109, 1
        %s262 = smul.addr %s261, 256
        %s263 = scalar_lea.vmem [#allocation6], %s262
        %p264 = pneg %p122
        %p265 = pneg %p119
        %p266 = pneg %p148
        %p267 = pneg %p145
        %s268 = sand.u32 %s135, 1
        %s269 = sand.u32 %s135, 1
        %s270 = smul.addr %s269, 8
        %s271 = scalar_lea.vmem [#allocation8], %s270
        %p272 = scmp.lt.s32.totalorder %s28, 3
        %s273 = scalar_select %p272, %s28, 3
        %s274 = smul.addr %s273, 2
        %s275 = scalar_lea.vmem %s2, %s274
        %s276 = sld [smem:[#allocation3 + %s28]]
        %s277 = scvt.s32.f32 %s276
        %s278 = smul.f32 %s277, 2.0
        %v279 = vstv %s278
        %v280 = vrcp.pop %v279
        %s281 = vtos %v280
        %v282 = vld [vmem:[%s275] sm:$0x3]
        %v283 = vld [vmem:[%s230] sm:$0xff]
        %v284 = vld [vmem:[%s230 + $0x8] sm:$0xff]
        %v285 = vld [vmem:[%s230 + $0x10] sm:$0xff]
        %v286 = vld [vmem:[%s230 + $0x18] sm:$0xff]
        %v287 = vld [vmem:[%s230 + $0x20] sm:$0xff]
        %v288 = vld [vmem:[%s230 + $0x28] sm:$0xff]
        %v289 = vld [vmem:[%s230 + $0x30] sm:$0xff]
        %v290 = vld [vmem:[%s230 + $0x38] sm:$0xff]
        %v291 = vld [vmem:[%s230 + $0x40] sm:$0xff]
        %v292 = vld [vmem:[%s230 + $0x48] sm:$0xff]
        %v293 = vld [vmem:[%s230 + $0x50] sm:$0xff]
        %v294 = vld [vmem:[%s230 + $0x58] sm:$0xff]
        %v295 = vld [vmem:[%s230 + $0x60] sm:$0xff]
        %v296 = vld [vmem:[%s230 + $0x68] sm:$0xff]
        %v297 = vld [vmem:[%s230 + $0x70] sm:$0xff]
        %v298 = vld [vmem:[%s230 + $0x78] sm:$0xff]
        %v299 = vld [vmem:[%s230 + $0x80] sm:$0xff]
        %v300 = vld [vmem:[%s230 + $0x88] sm:$0xff]
        %v301 = vld [vmem:[%s230 + $0x90] sm:$0xff]
        %v302 = vld [vmem:[%s230 + $0x98] sm:$0xff]
        %v303 = vld [vmem:[%s230 + $0xa0] sm:$0xff]
        %v304 = vld [vmem:[%s230 + $0xa8] sm:$0xff]
        %v305 = vld [vmem:[%s230 + $0xb0] sm:$0xff]
        %v306 = vld [vmem:[%s230 + $0xb8] sm:$0xff]
        %v307 = vld [vmem:[%s230 + $0xc0] sm:$0xff]
        %v308 = vld [vmem:[%s230 + $0xc8] sm:$0xff]
        %v309 = vld [vmem:[%s230 + $0xd0] sm:$0xff]
        %v310 = vld [vmem:[%s230 + $0xd8] sm:$0xff]
        %v311 = vld [vmem:[%s230 + $0xe0] sm:$0xff]
        %v312 = vld [vmem:[%s230 + $0xe8] sm:$0xff]
        %v313 = vld [vmem:[%s230 + $0xf0] sm:$0xff]
        %v314 = vld [vmem:[%s230 + $0xf8] sm:$0xff]
        %v315 = vld [vmem:[%s239] sm:$0xff]
        %v316 = vld [vmem:[%s239 + $0x8] sm:$0xff]
        %v317 = vld [vmem:[%s239 + $0x10] sm:$0xff]
        %v318 = vld [vmem:[%s239 + $0x18] sm:$0xff]
        %v319 = vld [vmem:[%s239 + $0x20] sm:$0xff]
        %v320 = vld [vmem:[%s239 + $0x28] sm:$0xff]
        %v321 = vld [vmem:[%s239 + $0x30] sm:$0xff]
        %v322 = vld [vmem:[%s239 + $0x38] sm:$0xff]
        %v323 = vld [vmem:[%s239 + $0x40] sm:$0xff]
        %v324 = vld [vmem:[%s239 + $0x48] sm:$0xff]
        %v325 = vld [vmem:[%s239 + $0x50] sm:$0xff]
        %v326 = vld [vmem:[%s239 + $0x58] sm:$0xff]
        %v327 = vld [vmem:[%s239 + $0x60] sm:$0xff]
        %v328 = vld [vmem:[%s239 + $0x68] sm:$0xff]
        %v329 = vld [vmem:[%s239 + $0x70] sm:$0xff]
        %v330 = vld [vmem:[%s239 + $0x78] sm:$0xff]
        %v331 = vld [vmem:[%s239 + $0x80] sm:$0xff]
        %v332 = vld [vmem:[%s239 + $0x88] sm:$0xff]
        %v333 = vld [vmem:[%s239 + $0x90] sm:$0xff]
        %v334 = vld [vmem:[%s239 + $0x98] sm:$0xff]
        %v335 = vld [vmem:[%s239 + $0xa0] sm:$0xff]
        %v336 = vld [vmem:[%s239 + $0xa8] sm:$0xff]
        %v337 = vld [vmem:[%s239 + $0xb0] sm:$0xff]
        %v338 = vld [vmem:[%s239 + $0xb8] sm:$0xff]
        %v339 = vld [vmem:[%s239 + $0xc0] sm:$0xff]
        %v340 = vld [vmem:[%s239 + $0xc8] sm:$0xff]
        %v341 = vld [vmem:[%s239 + $0xd0] sm:$0xff]
        %v342 = vld [vmem:[%s239 + $0xd8] sm:$0xff]
        %v343 = vld [vmem:[%s239 + $0xe0] sm:$0xff]
        %v344 = vld [vmem:[%s239 + $0xe8] sm:$0xff]
        %v345 = vld [vmem:[%s239 + $0xf0] sm:$0xff]
        %v346 = vld [vmem:[%s239 + $0xf8] sm:$0xff]
        %v347 = vld [vmem:[%s1] sm:$0xff]
        %v349 = vcombine.high %v347, %v347
        %351 = vmatprep.subr.mxu0 0.0
        %352 = vmatpush1.msra.mxu0 %v298
        %353 = vmatprep.subr.mxu0 0.0
        %354 = vmatpush1.msra.mxu0 %v297
        %355 = vmatprep.subr.mxu0 0.0
        %356 = vmatpush1.msra.mxu0 %v296
        %357 = vmatprep.subr.mxu0 0.0
        %358 = vmatpush1.msra.mxu0 %v295
        %359 = vmatprep.subr.mxu0 0.0
        %360 = vmatpush1.msra.mxu0 %v294
        %361 = vmatprep.subr.mxu0 0.0
        %362 = vmatpush1.msra.mxu0 %v293
        %363 = vmatprep.subr.mxu0 0.0
        %364 = vmatpush1.msra.mxu0 %v292
        %365 = vmatprep.subr.mxu0 0.0
        %366 = vmatpush1.msra.mxu0 %v291
        %367 = vmatprep.subr.mxu0 0.0
        %368 = vmatpush1.msra.mxu0 %v290
        %369 = vmatprep.subr.mxu0 0.0
        %370 = vmatpush1.msra.mxu0 %v289
        %371 = vmatprep.subr.mxu0 0.0
        %372 = vmatpush1.msra.mxu0 %v288
        %373 = vmatprep.subr.mxu0 0.0
        %374 = vmatpush1.msra.mxu0 %v287
        %375 = vmatprep.subr.mxu0 0.0
        %376 = vmatpush1.msra.mxu0 %v286
        %377 = vmatprep.subr.mxu0 0.0
        %378 = vmatpush1.msra.mxu0 %v285
        %379 = vmatprep.subr.mxu0 0.0
        %380 = vmatpush1.msra.mxu0 %v284
        %381 = vmatprep.subr.mxu0 0.0
        %382 = vmatpush1.msra.mxu0 %v283
        %383 = vmatprep.subr.mxu0 0.0
        %384 = vmatpush2.msra.mxu0 %v314
        %385 = vmatprep.subr.mxu0 0.0
        %386 = vmatpush2.msra.mxu0 %v313
        %387 = vmatprep.subr.mxu0 0.0
        %388 = vmatpush2.msra.mxu0 %v312
        %389 = vmatprep.subr.mxu0 0.0
        %390 = vmatpush2.msra.mxu0 %v311
        %391 = vmatprep.subr.mxu0 0.0
        %392 = vmatpush2.msra.mxu0 %v310
        %393 = vmatprep.subr.mxu0 0.0
        %394 = vmatpush2.msra.mxu0 %v309
        %395 = vmatprep.subr.mxu0 0.0
        %396 = vmatpush2.msra.mxu0 %v308
        %397 = vmatprep.subr.mxu0 0.0
        %398 = vmatpush2.msra.mxu0 %v307
        %399 = vmatprep.subr.mxu0 0.0
        %400 = vmatpush2.msra.mxu0 %v306
        %401 = vmatprep.subr.mxu0 0.0
        %402 = vmatpush2.msra.mxu0 %v305
        %403 = vmatprep.subr.mxu0 0.0
        %404 = vmatpush2.msra.mxu0 %v304
        %405 = vmatprep.subr.mxu0 0.0
        %406 = vmatpush2.msra.mxu0 %v303
        %407 = vmatprep.subr.mxu0 0.0
        %408 = vmatpush2.msra.mxu0 %v302
        %409 = vmatprep.subr.mxu0 0.0
        %410 = vmatpush2.msra.mxu0 %v301
        %411 = vmatprep.subr.mxu0 0.0
        %412 = vmatpush2.msra.mxu0 %v300
        %413 = vmatprep.subr.mxu0 0.0
        %414 = vmatpush2.msra.mxu0 %v299
        %415 = vmatprep.mubr.f32.mxu0 %v349
        %416 = vmatmul.mubr.f32.gmra.mxu0 %v347
        %v417 = vpop.f32.mrf.mxu0
        %v418 = vadd.f32 0.0, %v417
        %v419 = vpop.f32.mrf.mxu0
        %420 = vdwg.mxu0
        %vm421 = vcmask 31744
        %v423 = vsel %vm421, %v282, 0
        %vm425 = vcmask 1043456
        %v427 = vsel %vm425, %v418, 0
        %429 = vmatprep.subr.mxu0 0.0
        %430 = vmatpush1.msra.mxu0 0.0
        %431 = vmatprep.subr.mxu0 0.0
        %432 = vmatpush1.msra.mxu0 0.0
        %433 = vmatprep.subr.mxu0 0.0
        %434 = vmatpush1.msra.mxu0 0.0
        %435 = vmatprep.subr.mxu0 0.0
        %436 = vmatpush1.msra.mxu0 0.0
        %437 = vmatprep.subr.mxu0 0.0
        %438 = vmatpush1.msra.mxu0 0.0
        %439 = vmatprep.subr.mxu0 0.0
        %440 = vmatpush1.msra.mxu0 0.0
        %441 = vmatprep.subr.mxu0 0.0
        %442 = vmatpush1.msra.mxu0 0.0
        %443 = vmatprep.subr.mxu0 0.0
        %444 = vmatpush1.msra.mxu0 0.0
        %445 = vmatprep.subr.mxu0 0.0
        %446 = vmatpush1.msra.mxu0 0.0
        %447 = vmatprep.subr.mxu0 0.0
        %448 = vmatpush1.msra.mxu0 0.0
        %449 = vmatprep.subr.mxu0 0.0
        %450 = vmatpush1.msra.mxu0 0.0
        %451 = vmatprep.subr.mxu0 0.0
        %452 = vmatpush1.msra.mxu0 0.0
        %453 = vmatprep.subr.mxu0 0.0
        %454 = vmatpush1.msra.mxu0 0.0
        %455 = vmatprep.subr.mxu0 0.0
        %456 = vmatpush1.msra.mxu0 0.0
        %457 = vmatprep.subr.mxu0 0.0
        %458 = vmatpush1.msra.mxu0 0.0
        %459 = vmatprep.subr.mxu0 0.0
        %460 = vmatpush1.msra.mxu0 %v427
        %461 = vmatprep.subr.mxu0 0.0
        %462 = vmatpush2.msra.mxu0 0.0
        %463 = vmatprep.subr.mxu0 0.0
        %464 = vmatpush2.msra.mxu0 0.0
        %465 = vmatprep.subr.mxu0 0.0
        %466 = vmatpush2.msra.mxu0 0.0
        %467 = vmatprep.subr.mxu0 0.0
        %468 = vmatpush2.msra.mxu0 0.0
        %469 = vmatprep.subr.mxu0 0.0
        %470 = vmatpush2.msra.mxu0 0.0
        %471 = vmatprep.subr.mxu0 0.0
        %472 = vmatpush2.msra.mxu0 0.0
        %473 = vmatprep.subr.mxu0 0.0
        %474 = vmatpush2.msra.mxu0 0.0
        %475 = vmatprep.subr.mxu0 0.0
        %476 = vmatpush2.msra.mxu0 0.0
        %477 = vmatprep.subr.mxu0 0.0
        %478 = vmatpush2.msra.mxu0 0.0
        %479 = vmatprep.subr.mxu0 0.0
        %480 = vmatpush2.msra.mxu0 0.0
        %481 = vmatprep.subr.mxu0 0.0
        %482 = vmatpush2.msra.mxu0 0.0
        %483 = vmatprep.subr.mxu0 0.0
        %484 = vmatpush2.msra.mxu0 0.0
        %485 = vmatprep.subr.mxu0 0.0
        %486 = vmatpush2.msra.mxu0 0.0
        %487 = vmatprep.subr.mxu0 0.0
        %488 = vmatpush2.msra.mxu0 0.0
        %489 = vmatprep.subr.mxu0 0.0
        %490 = vmatpush2.msra.mxu0 0.0
        %491 = vmatprep.subr.mxu0 0.0
        %492 = vmatpush2.msra.mxu0 0.0
        %493 = vmatprep.mubr.f32.mxu0 0.0
        %494 = vmatmul.mubr.f32.gmra.mxu0 %v423
        %v495 = vpop.f32.mrf.mxu0
        %v496 = vadd.f32 0.0, %v495
        %v497 = vpop.f32.mrf.mxu0
        %498 = vdwg.mxu0
        %s499 = scalar_lea.vmem %s1, 8
        %v500 = vld [vmem:[%s499] sm:$0xff]
        %v502 = vcombine.high %v500, %v500
        %504 = vmatprep.subr.mxu0 0.0
        %505 = vmatpush1.msra.mxu0 %v298
        %506 = vmatprep.subr.mxu0 0.0
        %507 = vmatpush1.msra.mxu0 %v297
        %508 = vmatprep.subr.mxu0 0.0
        %509 = vmatpush1.msra.mxu0 %v296
        %510 = vmatprep.subr.mxu0 0.0
        %511 = vmatpush1.msra.mxu0 %v295
        %512 = vmatprep.subr.mxu0 0.0
        %513 = vmatpush1.msra.mxu0 %v294
        %514 = vmatprep.subr.mxu0 0.0
        %515 = vmatpush1.msra.mxu0 %v293
        %516 = vmatprep.subr.mxu0 0.0
        %517 = vmatpush1.msra.mxu0 %v292
        %518 = vmatprep.subr.mxu0 0.0
        %519 = vmatpush1.msra.mxu0 %v291
        %520 = vmatprep.subr.mxu0 0.0
        %521 = vmatpush1.msra.mxu0 %v290
        %522 = vmatprep.subr.mxu0 0.0
        %523 = vmatpush1.msra.mxu0 %v289
        %524 = vmatprep.subr.mxu0 0.0
        %525 = vmatpush1.msra.mxu0 %v288
        %526 = vmatprep.subr.mxu0 0.0
        %527 = vmatpush1.msra.mxu0 %v287
        %528 = vmatprep.subr.mxu0 0.0
        %529 = vmatpush1.msra.mxu0 %v286
        %530 = vmatprep.subr.mxu0 0.0
        %531 = vmatpush1.msra.mxu0 %v285
        %532 = vmatprep.subr.mxu0 0.0
        %533 = vmatpush1.msra.mxu0 %v284
        %534 = vmatprep.subr.mxu0 0.0
        %535 = vmatpush1.msra.mxu0 %v283
        %536 = vmatprep.subr.mxu0 0.0
        %537 = vmatpush2.msra.mxu0 %v314
        %538 = vmatprep.subr.mxu0 0.0
        %539 = vmatpush2.msra.mxu0 %v313
        %540 = vmatprep.subr.mxu0 0.0
        %541 = vmatpush2.msra.mxu0 %v312
        %542 = vmatprep.subr.mxu0 0.0
        %543 = vmatpush2.msra.mxu0 %v311
        %544 = vmatprep.subr.mxu0 0.0
        %545 = vmatpush2.msra.mxu0 %v310
        %546 = vmatprep.subr.mxu0 0.0
        %547 = vmatpush2.msra.mxu0 %v309
        %548 = vmatprep.subr.mxu0 0.0
        %549 = vmatpush2.msra.mxu0 %v308
        %550 = vmatprep.subr.mxu0 0.0
        %551 = vmatpush2.msra.mxu0 %v307
        %552 = vmatprep.subr.mxu0 0.0
        %553 = vmatpush2.msra.mxu0 %v306
        %554 = vmatprep.subr.mxu0 0.0
        %555 = vmatpush2.msra.mxu0 %v305
        %556 = vmatprep.subr.mxu0 0.0
        %557 = vmatpush2.msra.mxu0 %v304
        %558 = vmatprep.subr.mxu0 0.0
        %559 = vmatpush2.msra.mxu0 %v303
        %560 = vmatprep.subr.mxu0 0.0
        %561 = vmatpush2.msra.mxu0 %v302
        %562 = vmatprep.subr.mxu0 0.0
        %563 = vmatpush2.msra.mxu0 %v301
        %564 = vmatprep.subr.mxu0 0.0
        %565 = vmatpush2.msra.mxu0 %v300
        %566 = vmatprep.subr.mxu0 0.0
        %567 = vmatpush2.msra.mxu0 %v299
        %568 = vmatprep.mubr.f32.mxu0 %v502
        %569 = vmatmul.mubr.f32.gmra.mxu0 %v500
        %v570 = vpop.f32.mrf.mxu0
        %v571 = vadd.f32 0.0, %v570
        %v572 = vpop.f32.mrf.mxu0
        %573 = vdwg.mxu0
        %v575 = vsel %vm425, %v571, 0
        %577 = vmatprep.subr.mxu0 0.0
        %578 = vmatpush1.msra.mxu0 0.0
        %579 = vmatprep.subr.mxu0 0.0
        %580 = vmatpush1.msra.mxu0 0.0
        %581 = vmatprep.subr.mxu0 0.0
        %582 = vmatpush1.msra.mxu0 0.0
        %583 = vmatprep.subr.mxu0 0.0
        %584 = vmatpush1.msra.mxu0 0.0
        %585 = vmatprep.subr.mxu0 0.0
        %586 = vmatpush1.msra.mxu0 0.0
        %587 = vmatprep.subr.mxu0 0.0
        %588 = vmatpush1.msra.mxu0 0.0
        %589 = vmatprep.subr.mxu0 0.0
        %590 = vmatpush1.msra.mxu0 0.0
        %591 = vmatprep.subr.mxu0 0.0
        %592 = vmatpush1.msra.mxu0 0.0
        %593 = vmatprep.subr.mxu0 0.0
        %594 = vmatpush1.msra.mxu0 0.0
        %595 = vmatprep.subr.mxu0 0.0
        %596 = vmatpush1.msra.mxu0 0.0
        %597 = vmatprep.subr.mxu0 0.0
        %598 = vmatpush1.msra.mxu0 0.0
        %599 = vmatprep.subr.mxu0 0.0
        %600 = vmatpush1.msra.mxu0 0.0
        %601 = vmatprep.subr.mxu0 0.0
        %602 = vmatpush1.msra.mxu0 0.0
        %603 = vmatprep.subr.mxu0 0.0
        %604 = vmatpush1.msra.mxu0 0.0
        %605 = vmatprep.subr.mxu0 0.0
        %606 = vmatpush1.msra.mxu0 0.0
        %607 = vmatprep.subr.mxu0 0.0
        %608 = vmatpush1.msra.mxu0 %v575
        %609 = vmatprep.subr.mxu0 0.0
        %610 = vmatpush2.msra.mxu0 0.0
        %611 = vmatprep.subr.mxu0 0.0
        %612 = vmatpush2.msra.mxu0 0.0
        %613 = vmatprep.subr.mxu0 0.0
        %614 = vmatpush2.msra.mxu0 0.0
        %615 = vmatprep.subr.mxu0 0.0
        %616 = vmatpush2.msra.mxu0 0.0
        %617 = vmatprep.subr.mxu0 0.0
        %618 = vmatpush2.msra.mxu0 0.0
        %619 = vmatprep.subr.mxu0 0.0
        %620 = vmatpush2.msra.mxu0 0.0
        %621 = vmatprep.subr.mxu0 0.0
        %622 = vmatpush2.msra.mxu0 0.0
        %623 = vmatprep.subr.mxu0 0.0
        %624 = vmatpush2.msra.mxu0 0.0
        %625 = vmatprep.subr.mxu0 0.0
        %626 = vmatpush2.msra.mxu0 0.0
        %627 = vmatprep.subr.mxu0 0.0
        %628 = vmatpush2.msra.mxu0 0.0
        %629 = vmatprep.subr.mxu0 0.0
        %630 = vmatpush2.msra.mxu0 0.0
        %631 = vmatprep.subr.mxu0 0.0
        %632 = vmatpush2.msra.mxu0 0.0
        %633 = vmatprep.subr.mxu0 0.0
        %634 = vmatpush2.msra.mxu0 0.0
        %635 = vmatprep.subr.mxu0 0.0
        %636 = vmatpush2.msra.mxu0 0.0
        %637 = vmatprep.subr.mxu0 0.0
        %638 = vmatpush2.msra.mxu0 0.0
        %639 = vmatprep.subr.mxu0 0.0
        %640 = vmatpush2.msra.mxu0 0.0
        %641 = vmatprep.mubr.f32.mxu0 0.0
        %642 = vmatmul.mubr.f32.gmra.mxu0 %v423
        %v643 = vpop.f32.mrf.mxu0
        %v644 = vadd.f32 0.0, %v643
        %v645 = vpop.f32.mrf.mxu0
        %646 = vdwg.mxu0
        %vm647 = vcmask 1041408
        %v648 = vsel %vm647, %v496, 0.0
        %649 = vadd.xlane.f32.xlu0 %v648
        %v650 = vpop.xlane.xlu0 %649
        %v651 = vadd.f32 %v650, 0.0
        %v652 = vsel %vm647, %v644, 0.0
        %653 = vadd.xlane.f32.xlu0 %v652
        %v654 = vpop.xlane.xlu0 %653
        %v655 = vadd.f32 %v651, %v654
        %v656 = vstv %s281
        %v657 = vmul.f32 %v655, %v656
        %v658 = vlaneseq
        %v659 = vand.u32 %v658, 127
        %v660 = vstv %s276
        %vm661 = vcmp.lt.s32.totalorder %v659, %v660
        %v662 = vsub.f32 %v496, %v657
        %v663 = vsel %vm661, %v662, 0.0
        %v664 = vmul.f32 %v663, %v663
        %v665 = vsel %vm647, %v664, 0.0
        %666 = vadd.xlane.f32.xlu0 %v665
        %v667 = vpop.xlane.xlu0 %666
        %v668 = vadd.f32 %v667, 0.0
        %v669 = vsub.f32 %v644, %v657
        %v670 = vsel %vm661, %v669, 0.0
        %v671 = vmul.f32 %v670, %v670
        %v672 = vsel %vm647, %v671, 0.0
        %673 = vadd.xlane.f32.xlu0 %v672
        %v674 = vpop.xlane.xlu0 %673
        %v675 = vadd.f32 %v668, %v674
        %v676 = vmul.f32 %v675, %v656
        %v677 = vadd.f32 %v676, 1e-05
        %v678 = vrsqrt.pop %v677
        %v679 = vmul.f32 %v662, %v678
        %v680 = vmax.f32 %v679, 0.0
        %681 = vmatprep.subr.mxu0 %v346
        %682 = vmatpush1.msra.mxu0 %v345
        %683 = vmatprep.subr.mxu0 %v344
        %684 = vmatpush1.msra.mxu0 %v343
        %685 = vmatprep.subr.mxu0 %v342
        %686 = vmatpush1.msra.mxu0 %v341
        %687 = vmatprep.subr.mxu0 %v340
        %688 = vmatpush1.msra.mxu0 %v339
        %689 = vmatprep.subr.mxu0 %v338
        %690 = vmatpush1.msra.mxu0 %v337
        %691 = vmatprep.subr.mxu0 %v336
        %692 = vmatpush1.msra.mxu0 %v335
        %693 = vmatprep.subr.mxu0 %v334
        %694 = vmatpush1.msra.mxu0 %v333
        %695 = vmatprep.subr.mxu0 %v332
        %696 = vmatpush1.msra.mxu0 %v331
        %697 = vmatprep.subr.mxu0 %v330
        %698 = vmatpush1.msra.mxu0 %v329
        %699 = vmatprep.subr.mxu0 %v328
        %700 = vmatpush1.msra.mxu0 %v327
        %701 = vmatprep.subr.mxu0 %v326
        %702 = vmatpush1.msra.mxu0 %v325
        %703 = vmatprep.subr.mxu0 %v324
        %704 = vmatpush1.msra.mxu0 %v323
        %705 = vmatprep.subr.mxu0 %v322
        %706 = vmatpush1.msra.mxu0 %v321
        %707 = vmatprep.subr.mxu0 %v320
        %708 = vmatpush1.msra.mxu0 %v319
        %709 = vmatprep.subr.mxu0 %v318
        %710 = vmatpush1.msra.mxu0 %v317
        %711 = vmatprep.subr.mxu0 %v316
        %712 = vmatpush1.msra.mxu0 %v315
        %713 = vmatprep.subr.mxu0 0.0
        %714 = vmatpush2.msra.mxu0 0.0
        %715 = vmatprep.subr.mxu0 0.0
        %716 = vmatpush2.msra.mxu0 0.0
        %717 = vmatprep.subr.mxu0 0.0
        %718 = vmatpush2.msra.mxu0 0.0
        %719 = vmatprep.subr.mxu0 0.0
        %720 = vmatpush2.msra.mxu0 0.0
        %721 = vmatprep.subr.mxu0 0.0
        %722 = vmatpush2.msra.mxu0 0.0
        %723 = vmatprep.subr.mxu0 0.0
        %724 = vmatpush2.msra.mxu0 0.0
        %725 = vmatprep.subr.mxu0 0.0
        %726 = vmatpush2.msra.mxu0 0.0
        %727 = vmatprep.subr.mxu0 0.0
        %728 = vmatpush2.msra.mxu0 0.0
        %729 = vmatprep.subr.mxu0 0.0
        %730 = vmatpush2.msra.mxu0 0.0
        %731 = vmatprep.subr.mxu0 0.0
        %732 = vmatpush2.msra.mxu0 0.0
        %733 = vmatprep.subr.mxu0 0.0
        %734 = vmatpush2.msra.mxu0 0.0
        %735 = vmatprep.subr.mxu0 0.0
        %736 = vmatpush2.msra.mxu0 0.0
        %737 = vmatprep.subr.mxu0 0.0
        %738 = vmatpush2.msra.mxu0 0.0
        %739 = vmatprep.subr.mxu0 0.0
        %740 = vmatpush2.msra.mxu0 0.0
        %741 = vmatprep.subr.mxu0 0.0
        %742 = vmatpush2.msra.mxu0 0.0
        %743 = vmatprep.subr.mxu0 0.0
        %744 = vmatpush2.msra.mxu0 0.0
        %745 = vmatprep.mubr.f32.mxu0 0.0
        %746 = vmatmul.mubr.f32.gmra.mxu0 %v680
        %v747 = vpop.f32.mrf.mxu0
        %v748 = vadd.f32 0.0, %v747
        %v749 = vpop.f32.mrf.mxu0
        %v750 = vadd.f32 0.0, %v749
        %751 = vdwg.mxu0
        %v754 = vcombine.low %v748, %v750
        %v756 = vunpack.c.l.s4 1983009808
        %v757 = vunpack.c.0.s8 %v756
        %v758 = vlaneseq
        %v759 = vshrl.u32 %v758, 7
        %v760 = vsub.s32 %v757, %v759
        %v761 = vrot.slane %v754, %v760
        %763 = vst [vmem:[%s271] sm:$0xf] %v761
        %v764 = vmul.f32 %v669, %v678
        %v765 = vmax.f32 %v764, 0.0
        %766 = vmatprep.subr.mxu0 %v346
        %767 = vmatpush1.msra.mxu0 %v345
        %768 = vmatprep.subr.mxu0 %v344
        %769 = vmatpush1.msra.mxu0 %v343
        %770 = vmatprep.subr.mxu0 %v342
        %771 = vmatpush1.msra.mxu0 %v341
        %772 = vmatprep.subr.mxu0 %v340
        %773 = vmatpush1.msra.mxu0 %v339
        %774 = vmatprep.subr.mxu0 %v338
        %775 = vmatpush1.msra.mxu0 %v337
        %776 = vmatprep.subr.mxu0 %v336
        %777 = vmatpush1.msra.mxu0 %v335
        %778 = vmatprep.subr.mxu0 %v334
        %779 = vmatpush1.msra.mxu0 %v333
        %780 = vmatprep.subr.mxu0 %v332
        %781 = vmatpush1.msra.mxu0 %v331
        %782 = vmatprep.subr.mxu0 %v330
        %783 = vmatpush1.msra.mxu0 %v329
        %784 = vmatprep.subr.mxu0 %v328
        %785 = vmatpush1.msra.mxu0 %v327
        %786 = vmatprep.subr.mxu0 %v326
        %787 = vmatpush1.msra.mxu0 %v325
        %788 = vmatprep.subr.mxu0 %v324
        %789 = vmatpush1.msra.mxu0 %v323
        %790 = vmatprep.subr.mxu0 %v322
        %791 = vmatpush1.msra.mxu0 %v321
        %792 = vmatprep.subr.mxu0 %v320
        %793 = vmatpush1.msra.mxu0 %v319
        %794 = vmatprep.subr.mxu0 %v318
        %795 = vmatpush1.msra.mxu0 %v317
        %796 = vmatprep.subr.mxu0 %v316
        %797 = vmatpush1.msra.mxu0 %v315
        %798 = vmatprep.subr.mxu0 0.0
        %799 = vmatpush2.msra.mxu0 0.0
        %800 = vmatprep.subr.mxu0 0.0
        %801 = vmatpush2.msra.mxu0 0.0
        %802 = vmatprep.subr.mxu0 0.0
        %803 = vmatpush2.msra.mxu0 0.0
        %804 = vmatprep.subr.mxu0 0.0
        %805 = vmatpush2.msra.mxu0 0.0
        %806 = vmatprep.subr.mxu0 0.0
        %807 = vmatpush2.msra.mxu0 0.0
        %808 = vmatprep.subr.mxu0 0.0
        %809 = vmatpush2.msra.mxu0 0.0
        %810 = vmatprep.subr.mxu0 0.0
        %811 = vmatpush2.msra.mxu0 0.0
        %812 = vmatprep.subr.mxu0 0.0
        %813 = vmatpush2.msra.mxu0 0.0
        %814 = vmatprep.subr.mxu0 0.0
        %815 = vmatpush2.msra.mxu0 0.0
        %816 = vmatprep.subr.mxu0 0.0
        %817 = vmatpush2.msra.mxu0 0.0
        %818 = vmatprep.subr.mxu0 0.0
        %819 = vmatpush2.msra.mxu0 0.0
        %820 = vmatprep.subr.mxu0 0.0
        %821 = vmatpush2.msra.mxu0 0.0
        %822 = vmatprep.subr.mxu0 0.0
        %823 = vmatpush2.msra.mxu0 0.0
        %824 = vmatprep.subr.mxu0 0.0
        %825 = vmatpush2.msra.mxu0 0.0
        %826 = vmatprep.subr.mxu0 0.0
        %827 = vmatpush2.msra.mxu0 0.0
        %828 = vmatprep.subr.mxu0 0.0
        %829 = vmatpush2.msra.mxu0 0.0
        %830 = vmatprep.mubr.f32.mxu0 0.0
        %831 = vmatmul.mubr.f32.gmra.mxu0 %v765
        %v832 = vpop.f32.mrf.mxu0
        %v833 = vadd.f32 0.0, %v832
        %v834 = vpop.f32.mrf.mxu0
        %v835 = vadd.f32 0.0, %v834
        %836 = vdwg.mxu0
        %v839 = vcombine.low %v833, %v835
        %v841 = vunpack.c.l.s4 1983009808
        %v842 = vunpack.c.0.s8 %v841
        %v843 = vlaneseq
        %v844 = vshrl.u32 %v843, 7
        %v845 = vsub.s32 %v842, %v844
        %v846 = vrot.slane %v839, %v845
        %s848 = scalar_lea.vmem %s271, 4 [#allocation8]
        %849 = vst [vmem:[%s848] sm:$0xf] %v846
        %s850 = sand.u32 %s135, 1
        %s851 = sand.u32 %s135, 1
        %s852 = smul.addr %s851, 8
        %s853 = scalar_lea.vmem [#allocation8], %s852
        // Predicated region
        $region45: #{ppm_forward.1} parent=35 // pred_check
          %p854 = pneg %p145
        $region46: #{ppm_forward.1} parent=35 // pred_check_branch
          %856 = sbr.rel (%p854) target = $region48
        $region47: #{ppm_forward.1} parent=35 // pred_region
          %s857 = smul.addr %s28, 2
          %s858 = smul.addr %s857, 2
          %s859 = scalar_lea.vmem %s5, %s858
          // Predicated region
          $region49: #{ppm_forward.1} parent=47 // pred_check
            _
          $region50: #{ppm_forward.1} parent=47 // pred_check_branch
            %861 = sbr.rel (0) target = $region52
          $region51: #{ppm_forward.1} parent=47 // pred_region
            // Predicated region
            $region53: #{ppm_forward.1} parent=51 // pred_check
              _
            $region54: #{ppm_forward.1} parent=51 // pred_check_branch
              %863 = sbr.rel target = $region56
            $region55: #{ppm_forward.1} parent=51 // pred_region
              // Predicated region
              $region68: #{ppm_forward.1} parent=55 // pred_check
                _
              $region69: #{ppm_forward.1} parent=55 // pred_check_branch
                %881 = sbr.rel (0) target = $region71
              $region70: #{ppm_forward.1} parent=55 // pred_region
                loop: start=0, step=1, limit=1
                $region72: #{ppm_forward.1} parent=70 // loop_pre_header
                  _
                $region73: #{ppm_forward.1} parent=70 // loop_header
                  %s883 = sphi 0, %s887
                  %p884 = scmp.ge.s32.totalorder %s883, 1
                  %s888 = sphi %s853, %s853
                  %s889 = sphi %s859, %s859
                $region74: #{ppm_forward.1} parent=70 // loop_header_branch
                  %886 = sbr.rel (%p884) target = $region78
                $region75: #{ppm_forward.1} parent=70 // loop_body
                  _
                $region76: #{ppm_forward.1} parent=70 // loop_footer
                  %s887 = sadd.s32 1, %s883
                $region77: #{ppm_forward.1} parent=70 // loop_footer_branch
                  %882 = sbr.rel target = $region73
                $region78: #{ppm_forward.1} parent=70 // loop_exit
                  _
                %s891 = ssub.s32 16, 1
                loop: start=0, step=1, limit=1
                $region79: #{ppm_forward.1} parent=70 // loop_pre_header
                  _
                $region80: #{ppm_forward.1} parent=70 // loop_header
                  %s893 = sphi 0, %s897
                  %p894 = scmp.ge.s32.totalorder %s893, 1
                  %s898 = sphi %s853, %s853
                  %s899 = sphi %s859, %s859
                $region81: #{ppm_forward.1} parent=70 // loop_header_branch
                  %896 = sbr.rel (%p894) target = $region85
                $region82: #{ppm_forward.1} parent=70 // loop_body
                  %v900 = vld [vmem:[%s898] sm:%s891]
                  %901 = vst [vmem:[%s899] sm:%s891] %v900
                  %v902 = vld [vmem:[%s898 + $0x4] sm:%s891]
                  %903 = vst [vmem:[%s899 + $0x10] sm:%s891] %v902
                $region83: #{ppm_forward.1} parent=70 // loop_footer
                  %s897 = sadd.s32 1, %s893
                $region84: #{ppm_forward.1} parent=70 // loop_footer_branch
                  %892 = sbr.rel target = $region80
                $region85: #{ppm_forward.1} parent=70 // loop_exit
                  _
              $region71: #{ppm_forward.1} parent=55 // pred_fallthru
                _
            $region56: #{ppm_forward.1} parent=51 // pred_fallthru
              _
            // Predicated region
            $region57: #{ppm_forward.1} parent=51 // pred_check
              _
            $region58: #{ppm_forward.1} parent=51 // pred_check_branch
              %865 = sbr.rel (0) target = $region60
            $region59: #{ppm_forward.1} parent=51 // pred_region
              %s867 = ssub.s32 16, 1
              loop: start=0, step=1, limit=1
              $region61: #{ppm_forward.1} parent=59 // loop_pre_header
                _
              $region62: #{ppm_forward.1} parent=59 // loop_header
                %s869 = sphi 0, %s873
                %p870 = scmp.ge.s32.totalorder %s869, 1
                %s874 = sphi %s853, %s853
                %s875 = sphi %s859, %s859
              $region63: #{ppm_forward.1} parent=59 // loop_header_branch
                %872 = sbr.rel (%p870) target = $region67
              $region64: #{ppm_forward.1} parent=59 // loop_body
                %v876 = vld [vmem:[%s874] sm:%s867]
                %877 = vst [vmem:[%s875] sm:%s867] %v876
                %v878 = vld [vmem:[%s874 + $0x4] sm:%s867]
                %879 = vst [vmem:[%s875 + $0x10] sm:%s867] %v878
              $region65: #{ppm_forward.1} parent=59 // loop_footer
                %s873 = sadd.s32 1, %s869
              $region66: #{ppm_forward.1} parent=59 // loop_footer_branch
                %868 = sbr.rel target = $region62
              $region67: #{ppm_forward.1} parent=59 // loop_exit
                _
            $region60: #{ppm_forward.1} parent=51 // pred_fallthru
              _
          $region52: #{ppm_forward.1} parent=47 // pred_fallthru
            _
          %904 = vnop
        $region48: #{ppm_forward.1} parent=35 // pred_fallthru
          _
      $region36: #{ppm_forward.1} parent=5 // pred_fallthru
        _
      %p905 = scmp.le.s32.totalorder 2, %s23
      // Predicated region
      $region86: #{ppm_forward.1} parent=5 // pred_check
        %p906 = pneg %p905
      $region87: #{ppm_forward.1} parent=5 // pred_check_branch
        %908 = sbr.rel (%p906) target = $region89
      $region88: #{ppm_forward.1} parent=5 // pred_region
        %s909 = ssub.s32 %s23, 2
        // Predicated region
        $region90: #{ppm_forward.1} parent=88 // pred_check
          %p910 = pneg %p151
        $region91: #{ppm_forward.1} parent=88 // pred_check_branch
          %912 = sbr.rel (%p910) target = $region93
        $region92: #{ppm_forward.1} parent=88 // pred_region
          %s913 = sand.u32 %s136, 1
          %s914 = sand.u32 %s136, 1
          %s915 = smul.addr %s914, 8
          %s916 = scalar_lea.vmem [#allocation8], %s915
        $region93: #{ppm_forward.1} parent=88 // pred_fallthru
          _
      $region89: #{ppm_forward.1} parent=5 // pred_fallthru
        _
    $region6: #{ppm_forward.1} parent=1 // loop_footer
      %s27 = sadd.s32 1, %s23
    $region7: #{ppm_forward.1} parent=1 // loop_footer_branch
      %22 = sbr.rel target = $region3
    $region8: #{ppm_forward.1} parent=1 // loop_exit
      _
    %917 = vsyncpa [#allocation5], 1
    %s918 = scalar_lea.sflag [#allocation5], 1
    %919 = vsyncpa %s918, 1
    %920 = vsyncpa [#allocation7], 1
    %s921 = scalar_lea.sflag [#allocation7], 1
    %922 = vsyncpa %s921, 1

</llo_original>
